<compile_context>
chip_gen: v7x
topology: tpu7x:2x2x1
jax: 0.10.0
libtpu: 0.0.40
codegen_flags: <defaults>
</compile_context>

<pallas_src>
import jax
import jax.numpy as jnp
from jax.experimental import pallas as pl
from jax.experimental.pallas import tpu as pltpu


def _barycenter_kernel(x_ref, w_ref, o_ref):
    # x_ref: (TILE_M, T), w_ref: (T, 1) (already scaled by 1/n), o_ref: (TILE_M, 1)
    o_ref[...] = jnp.dot(
        x_ref[...], w_ref[...], preferred_element_type=jnp.float32
    ).astype(o_ref.dtype)


def _choose_block_rows(M, T, itemsize):
    """Pick a row-tile size: multiple of 8, per-buffer bytes <= ~4 MiB, <= 1024 rows."""
    per_buf_cap = 4 * 1024 * 1024  # conservative so 2x buffers fit every gen (incl. v7x)
    rows_by_vmem = max(8, (per_buf_cap // max(1, T * itemsize)) // 8 * 8)
    m_rounded = -(-M // 8) * 8  # M rounded up to a multiple of 8
    return max(8, min(1024, rows_by_vmem, m_rounded))


def barycenter_forward(x, weight, *, block_rows=None):
    """Pallas implementation of Barycenter.forward.

    x:      (B, D, T) float32
    weight: (T,)      float32
    returns (B, D, 1) float32
    """
    B, D, T = x.shape
    n = T
    M = B * D

    # Glue (done once, outside the grid): flatten rows, fold 1/n into the
    # weight column so the kernel is a pure matvec.
    x2 = x.reshape(M, T)
    w_col = (weight.astype(jnp.float32) * (1.0 / n)).reshape(T, 1)

    if block_rows is None:
        block_rows = _choose_block_rows(M, T, jnp.dtype(x.dtype).itemsize)

    grid = (pl.cdiv(M, block_rows),)

    out2 = pl.pallas_call(
        _barycenter_kernel,
        out_shape=jax.ShapeDtypeStruct((M, 1), x.dtype),
        grid=grid,
        in_specs=[
            pl.BlockSpec((block_rows, T), lambda i: (i, 0)),  # streaming row tiles of x
            pl.BlockSpec((T, 1), lambda i: (0, 0)),           # shared weight column
        ],
        out_specs=pl.BlockSpec((block_rows, 1), lambda i: (i, 0)),
        compiler_params=pltpu.CompilerParams(
            dimension_semantics=("parallel",),
            vmem_limit_bytes=32 * 1024 * 1024,
        ),
    )(x2, w_col)

    return out2.reshape(B, D, 1)


class Barycenter:
    """JAX/Pallas port of olympus.layers.barycenter.Barycenter (forward only)."""

    def __init__(self, input_shape):
        # weight initialized to ones, exactly like nn.Parameter(torch.ones(T))
        self.n = input_shape[1]
        self.weight = jnp.ones((self.n,), dtype=jnp.float32)

    def __call__(self, x):
        return barycenter_forward(x, self.weight)

    # TODO(synk): `smooth()` mutates the parameter with a rolling median; it is a
    # training-time utility, not part of the forward pass, so it is not ported.


if __name__ == "__main__":
    key = jax.random.PRNGKey(0)

    # Small shapes consistent with the module's docstring example.
    batch_size, D, T = 3, 10, 20
    x = jax.random.normal(key, (batch_size, D, T), dtype=jnp.float32)

    layer = Barycenter((D, T))
    out = layer(x)
    out = jax.block_until_ready(out)

    # With weight = ones, forward == mean over the last axis (keepdims).
    ref = jnp.mean(x, axis=2, keepdims=True)
    assert out.shape == (batch_size, D, 1), out.shape
    assert jnp.abs(out - ref).sum() < 1e-5, float(jnp.abs(out - ref).sum())

    # Also exercise a larger shape so the row-tiled grid has multiple steps.
    B2, D2, T2 = 4, 3000, 20
    x_big = jax.random.normal(jax.random.PRNGKey(1), (B2, D2, T2), dtype=jnp.float32)
    layer_big = Barycenter((D2, T2))
    out_big = jax.block_until_ready(layer_big(x_big))
    ref_big = jnp.mean(x_big, axis=2, keepdims=True)
    assert out_big.shape == (B2, D2, 1), out_big.shape
    assert jnp.max(jnp.abs(out_big - ref_big)) < 1e-5

    print("KERNEL_OK")
</pallas_src>

<mosaic_0001>
module attributes {stable_mosaic.version = 11 : i64} {
  func.func @_barycenter_kernel(%arg0: i32, %arg1: memref<32x20xf32, #tpu.memory_space<vmem>>, %arg2: memref<20x1xf32, #tpu.memory_space<vmem>>, %arg3: memref<32x1xf32, #tpu.memory_space<vmem>>) attributes {dimension_semantics = [#tpu.dimension_semantics<parallel>], iteration_bounds = array<i64: 1>, scalar_prefetch = 0 : i64, scratch_operands = 0 : i64, tpu.core_type = #tpu.core_type<tc>, window_params = [{transform_indices = @transform_0, window_bounds = array<i64: 32, 20>}, {pipeline_mode = #tpu.pipeline_mode<synchronous>, transform_indices = @transform_1, window_bounds = array<i64: 20, 1>}, {transform_indices = @transform_2, window_bounds = array<i64: 32, 1>}]} {
    %c0 = arith.constant 0 : index
    %c0_0 = arith.constant 0 : index
    %0 = vector.load %arg1[%c0, %c0_0] : memref<32x20xf32, #tpu.memory_space<vmem>>, vector<32x20xf32>
    %c0_1 = arith.constant 0 : index
    %c0_2 = arith.constant 0 : index
    %1 = vector.load %arg2[%c0_1, %c0_2] : memref<20x1xf32, #tpu.memory_space<vmem>>, vector<20x1xf32>
    %cst = arith.constant dense<0.000000e+00> : vector<32x1xf32>
    %2 = tpu.matmul %0, %1, %cst {dimension_numbers = #tpu.dot_dimension_numbers<[1], [0], [0], [1], [0, 0, 1, 1], [], []>} : vector<32x20xf32>, vector<20x1xf32>, vector<32x1xf32> -> vector<32x1xf32>
    %c0_3 = arith.constant 0 : index
    %c0_4 = arith.constant 0 : index
    %3 = vector.load %arg3[%c0_3, %c0_4] : memref<32x1xf32, #tpu.memory_space<vmem>>, vector<32x1xf32>
    tpu.vector_store %arg3[%c0_3, %c0_4], %2 {strides = array<i32>} : memref<32x1xf32, #tpu.memory_space<vmem>>, vector<32x1xf32>,
    return
  }
  func.func @transform_0(%arg0: i32) -> (i32, i32) {
    %c0_i32 = arith.constant 0 : i32
    %c0_i32_0 = arith.constant 0 : i32
    return %arg0, %c0_i32 : i32, i32
  }
  func.func @transform_1(%arg0: i32) -> (i32, i32) {
    %c0_i32 = arith.constant 0 : i32
    %c0_i32_0 = arith.constant 0 : i32
    %c0_i32_1 = arith.constant 0 : i32
    return %c0_i32, %c0_i32_0 : i32, i32
  }
  func.func @transform_2(%arg0: i32) -> (i32, i32) {
    %c0_i32 = arith.constant 0 : i32
    %c0_i32_0 = arith.constant 0 : i32
    return %arg0, %c0_i32 : i32, i32
  }
}

</mosaic_0001>

<llo_original>
// kernel: tpu_custom_call.1
$region0: #{tpu_custom_call.1}
  #allocation0 [shape = 'u32[]', space=smem, size = 0x4, offset = 0x4, fixed_abs, tag = 'smem constant byte address 0x4 - core index']
  #allocation1 [shape = 'u32[144,128]{1,0:T(1,128)}', space=vmem, size = 0x12000, scoped, tag = 'internal scratch']
  %s0 = inlined_call_operand.vmem [shape: f32[30,20], index: 0, kind: input, shape index: {}]
  %s1 = inlined_call_operand.vmem [shape: f32[20,1], index: 1, kind: input, shape index: {}]
  %s2 = inlined_call_operand.vmem [shape: f32[30,1], index: 2, kind: output, shape index: {}]
  %s3 = sld [smem:[#allocation0]]
  $region18: #{tpu_custom_call.1} parent=0
    _
  %s5 = ssub.s32 1, %s3
  %s6 = scalar_select 0, %s5, %s3
  // Predicated region
  $region2: #{tpu_custom_call.1} parent=0 // pred_check
    _
  $region3: #{tpu_custom_call.1} parent=0 // pred_check_branch
    %8 = sbr.rel (0) target = $region5
  $region4: #{tpu_custom_call.1} parent=0 // pred_region
    _
  $region5: #{tpu_custom_call.1} parent=0 // pred_fallthru
    _
  // Predicated region
  $region6: #{tpu_custom_call.1} parent=0 // pred_check
    _
  $region7: #{tpu_custom_call.1} parent=0 // pred_check_branch
    %10 = sbr.rel (0) target = $region9
  $region8: #{tpu_custom_call.1} parent=0 // pred_region
    _
  $region9: #{tpu_custom_call.1} parent=0 // pred_fallthru
    _
  %v11 = vld [vmem:[%s0] sm:$0xff]
  %v12 = vld [vmem:[%s0 + $0x8] sm:$0xff]
  %v13 = vld [vmem:[%s0 + $0x10] sm:$0xff]
  %v14 = vld [vmem:[%s0 + $0x18] sm:$0xff]
  %v15 = vld [vmem:[%s1] sm:$0xff]
  %v16 = vld [vmem:[%s1 + $0x8] sm:$0xff]
  %v17 = vld [vmem:[%s1 + $0x10] sm:$0xf]
  %vm18 = vcmask 162816
  %v20 = vsel %vm18, %v11, 0
  %v23 = vsel %vm18, %v12, 0
  %v26 = vsel %vm18, %v13, 0
  %v29 = vsel %vm18, %v14, 0
  %vm31 = vcmask 1043456
  %v33 = vsel %vm31, %v17, 0
  %35 = vmatprep.subr.mxu0 0.0
  %36 = vmatpush1.msra.mxu0 %v15
  %37 = vmatprep.subr.mxu0 0.0
  %38 = vmatpush1.msra.mxu0 %v16
  %39 = vmatprep.subr.mxu0 0.0
  %40 = vmatpush1.msra.mxu0 %v33
  %41 = vmatprep.subr.mxu0 0.0
  %42 = vmatpush1.msra.mxu0 0.0
  %43 = vmatprep.subr.mxu0 0.0
  %44 = vmatpush1.msra.mxu0 0.0
  %45 = vmatprep.subr.mxu0 0.0
  %46 = vmatpush1.msra.mxu0 0.0
  %47 = vmatprep.subr.mxu0 0.0
  %48 = vmatpush1.msra.mxu0 0.0
  %49 = vmatprep.subr.mxu0 0.0
  %50 = vmatpush1.msra.mxu0 0.0
  %51 = vmatprep.subr.mxu0 0.0
  %52 = vmatpush1.msra.mxu0 0.0
  %53 = vmatprep.subr.mxu0 0.0
  %54 = vmatpush1.msra.mxu0 0.0
  %55 = vmatprep.subr.mxu0 0.0
  %56 = vmatpush1.msra.mxu0 0.0
  %57 = vmatprep.subr.mxu0 0.0
  %58 = vmatpush1.msra.mxu0 0.0
  %59 = vmatprep.subr.mxu0 0.0
  %60 = vmatpush1.msra.mxu0 0.0
  %61 = vmatprep.subr.mxu0 0.0
  %62 = vmatpush1.msra.mxu0 0.0
  %63 = vmatprep.subr.mxu0 0.0
  %64 = vmatpush1.msra.mxu0 0.0
  %65 = vmatprep.subr.mxu0 0.0
  %66 = vmatpush1.msra.mxu0 0.0
  %67 = vmatprep.subr.mxu0 0.0
  %68 = vmatpush1.msra.mxu0 0.0
  %69 = vmatprep.subr.mxu0 0.0
  %70 = vmatpush1.msra.mxu0 0.0
  %71 = vmatprep.subr.mxu0 0.0
  %72 = vmatpush1.msra.mxu0 0.0
  %73 = vmatprep.subr.mxu0 0.0
  %74 = vmatpush1.msra.mxu0 0.0
  %75 = vmatprep.subr.mxu0 0.0
  %76 = vmatpush1.msra.mxu0 0.0
  %77 = vmatprep.subr.mxu0 0.0
  %78 = vmatpush1.msra.mxu0 0.0
  %79 = vmatprep.subr.mxu0 0.0
  %80 = vmatpush1.msra.mxu0 0.0
  %81 = vmatprep.subr.mxu0 0.0
  %82 = vmatpush1.msra.mxu0 0.0
  %83 = vmatprep.subr.mxu0 0.0
  %84 = vmatpush1.msra.mxu0 0.0
  %85 = vmatprep.subr.mxu0 0.0
  %86 = vmatpush1.msra.mxu0 0.0
  %87 = vmatprep.subr.mxu0 0.0
  %88 = vmatpush1.msra.mxu0 0.0
  %89 = vmatprep.subr.mxu0 0.0
  %90 = vmatpush1.msra.mxu0 0.0
  %91 = vmatprep.subr.mxu0 0.0
  %92 = vmatpush1.msra.mxu0 0.0
  %93 = vmatprep.subr.mxu0 0.0
  %94 = vmatpush1.msra.mxu0 0.0
  %95 = vmatprep.subr.mxu0 0.0
  %96 = vmatpush1.msra.mxu0 0.0
  %97 = vmatprep.subr.mxu0 0.0
  %98 = vmatpush1.msra.mxu0 0.0
  %99 = vmatprep.mubr.f32.mxu0 0.0
  %100 = vmatmul.mubr.f32.gmra.mrb[0].mxu0 %v20
  %v101 = vpop.f32.mrb[0].mxu0
  %v102 = vadd.f32 0.0, %v101
  %v103 = vpop.f32.mrb[0].mxu0
  %104 = vmatprep.mubr.f32.mxu0 0.0
  %105 = vmatmul.mubr.f32.gmra.mrb[0].mxu0 %v23
  %v106 = vpop.f32.mrb[0].mxu0
  %v107 = vadd.f32 0.0, %v106
  %v108 = vpop.f32.mrb[0].mxu0
  %109 = vmatprep.mubr.f32.mxu0 0.0
  %110 = vmatmul.mubr.f32.gmra.mrb[0].mxu0 %v26
  %v111 = vpop.f32.mrb[0].mxu0
  %v112 = vadd.f32 0.0, %v111
  %v113 = vpop.f32.mrb[0].mxu0
  %114 = vmatprep.mubr.f32.mxu0 0.0
  %115 = vmatmul.mubr.f32.gmra.mrb[0].mxu0 %v29
  %v116 = vpop.f32.mrb[0].mxu0
  %v117 = vadd.f32 0.0, %v116
  %v118 = vpop.f32.mrb[0].mxu0
  %119 = vdwg.mxu0
  %vm120 = vcmask 7168
  %121 = vst.msk [vmem:[%s2] sm:$0xff] %vm120, %v102
  %122 = vst.msk [vmem:[%s2 + $0x8] sm:$0xff] %vm120, %v107
  %123 = vst.msk [vmem:[%s2 + $0x10] sm:$0xff] %vm120, %v112
  %124 = vst.msk [vmem:[%s2 + $0x18] sm:$0xff] %vm120, %v117
  // Predicated region
  $region10: #{tpu_custom_call.1} parent=0 // pred_check
    _
  $region11: #{tpu_custom_call.1} parent=0 // pred_check_branch
    %126 = sbr.rel (0) target = $region13
  $region12: #{tpu_custom_call.1} parent=0 // pred_region
    _
  $region13: #{tpu_custom_call.1} parent=0 // pred_fallthru
    _
  // Predicated region
  $region14: #{tpu_custom_call.1} parent=0 // pred_check
    _
  $region15: #{tpu_custom_call.1} parent=0 // pred_check_branch
    %128 = sbr.rel (0) target = $region17
  $region16: #{tpu_custom_call.1} parent=0 // pred_region
    _
  $region17: #{tpu_custom_call.1} parent=0 // pred_fallthru
    _

</llo_original>
